<compile_context>
chip_gen: v7x
topology: tpu7x:2x2x1
jax: 0.10.0
libtpu: 0.0.40
codegen_flags: <defaults>
</compile_context>

<pallas_src>
import jax
import jax.numpy as jnp
from jax.experimental import pallas as pl
from jax.experimental.pallas import tpu as pltpu


def _round_up(n: int, m: int) -> int:
    return ((n + m - 1) // m) * m


def vae_bottleneck_kernel(x_ref, w_ref, b_ref, eps_ref, out_ref):
    """One row-block of the VAE bottleneck.

    x_ref   : (bm, 2F)   flattened input rows
    w_ref   : (2F, 2F)   fused [W_mu | W_var]
    b_ref   : (1, 2F)    fused [b_mu | b_var]
    eps_ref : (bm, F)    N(0,1) noise
    out_ref : (bm, 3F)   lane-dense slab [z | mu | std]
    """
    x = x_ref[...]                                             # (bm, 2F)

    # Single MXU matmul covering both projections (full 128-lane result at F=64).
    proj = jnp.dot(x, w_ref[...], preferred_element_type=jnp.float32)
    proj = proj + b_ref[...]                                   # broadcast (1, 2F)

    f = proj.shape[1] // 2
    mu = proj[:, :f]                                           # lanes 0:F
    log_var = proj[:, f:]                                      # lanes F:2F

    std = jnp.exp(0.5 * log_var)                               # EUP
    z = mu + eps_ref[...] * std                                # VPU

    # One lane-dense store instead of three half-masked F-lane stores.
    out_ref[...] = jnp.concatenate([z, mu, std], axis=-1)


def vae_bottleneck(x, w_mu, b_mu, w_var, b_var, eps, *, block_b=512):
    """x: (B, ...) flattening to (B, 2*F). Returns (z=(B,1,F), mu=(B,F), std=(B,F))."""
    B = x.shape[0]
    x_flat = x.reshape(B, -1).astype(jnp.float32)
    in_dim = x_flat.shape[1]
    F = w_mu.shape[1]
    assert in_dim == 2 * F, (in_dim, F)

    # Fuse the two linear layers: one (2F, 2F) weight, one (1, 2F) bias.
    w_fused = jnp.concatenate([w_mu, w_var], axis=1).astype(jnp.float32)
    b_fused = jnp.concatenate([b_mu, b_var]).reshape(1, 2 * F).astype(jnp.float32)

    # Row-block size: large, multiple of 8; pad the batch up to a block multiple.
    bm = min(block_b, _round_up(B, 8))
    bm = max(8, (bm // 8) * 8)
    # Prefer >= 2 grid steps when the batch allows (keeps both v7x TCs busy).
    if _round_up(B, bm) // bm < 2 and B > 8:
        bm = max(8, _round_up((B + 1) // 2, 8))
    Bp = _round_up(B, bm)

    eps = eps.astype(jnp.float32)
    if Bp != B:
        pad = Bp - B
        x_flat = jnp.pad(x_flat, ((0, pad), (0, 0)))
        eps = jnp.pad(eps, ((0, pad), (0, 0)))

    grid = (Bp // bm,)

    out = pl.pallas_call(
        vae_bottleneck_kernel,
        out_shape=jax.ShapeDtypeStruct((Bp, 3 * F), jnp.float32),
        grid_spec=pltpu.PrefetchScalarGridSpec(
            num_scalar_prefetch=0,
            grid=grid,
            in_specs=[
                pl.BlockSpec((bm, 2 * F), lambda i: (i, 0)),       # x rows
                pl.BlockSpec((2 * F, 2 * F), lambda i: (0, 0)),    # fused W (grid-invariant)
                pl.BlockSpec((1, 2 * F), lambda i: (0, 0)),        # fused b (grid-invariant)
                pl.BlockSpec((bm, F), lambda i: (i, 0)),           # eps rows
            ],
            out_specs=pl.BlockSpec((bm, 3 * F), lambda i: (i, 0)),  # [z|mu|std] slab
        ),
        compiler_params=pltpu.CompilerParams(
            dimension_semantics=("parallel",)),
    )(x_flat, w_fused, b_fused, eps)

    z = out[:B, 0 * F:1 * F][:, None, :]       # torch.unsqueeze(z, dim=1)
    mu = out[:B, 1 * F:2 * F]
    std = out[:B, 2 * F:3 * F]
    return z, mu, std


if __name__ == "__main__":
    # args.feat_dims = 64  ->  Linear(128 -> 64)
    FEAT = 64
    B = 8

    key = jax.random.PRNGKey(0)
    k_x, k_wmu, k_bmu, k_wvar, k_bvar, k_eps, k_x2, k_eps2 = jax.random.split(key, 8)

    # Input: (B, 2, FEAT) flattens to (B, 2*FEAT)
    x = jax.random.normal(k_x, (B, 2, FEAT), dtype=jnp.float32)

    # PyTorch Linear weight is (out, in); we store the transposed (in, out) form.
    scale = 1.0 / jnp.sqrt(2.0 * FEAT)
    w_mu = jax.random.uniform(k_wmu, (2 * FEAT, FEAT), jnp.float32, -scale, scale)
    b_mu = jax.random.uniform(k_bmu, (FEAT,), jnp.float32, -scale, scale)
    w_var = jax.random.uniform(k_wvar, (2 * FEAT, FEAT), jnp.float32, -scale, scale)
    b_var = jax.random.uniform(k_bvar, (FEAT,), jnp.float32, -scale, scale)

    # eps ~ N(0, 1) drawn in the wrapper (torch.randn_like equivalent).
    # TODO(synk): could instead draw in-kernel via pltpu.prng_seed/prng_random_bits.
    eps = jax.random.normal(k_eps, (B, FEAT), dtype=jnp.float32)

    z, mu, std = vae_bottleneck(x, w_mu, b_mu, w_var, b_var, eps)
    jax.block_until_ready((z, mu, std))

    # Sanity check vs. pure-JAX reference
    x_flat = x.reshape(B, -1)
    mu_ref = x_flat @ w_mu + b_mu
    std_ref = jnp.exp(0.5 * (x_flat @ w_var + b_var))
    z_ref = (mu_ref + eps * std_ref)[:, None, :]
    assert z.shape == (B, 1, FEAT) and mu.shape == (B, FEAT) and std.shape == (B, FEAT)
    assert jnp.allclose(mu, mu_ref, atol=1e-5)
    assert jnp.allclose(std, std_ref, atol=1e-5)
    assert jnp.allclose(z, z_ref, atol=1e-5)

    # Second check: batch not divisible by the row block (exercises batch
    # padding + a multi-step grid, i.e. the megacore-friendly path).
    B2 = 20
    x2 = jax.random.normal(k_x2, (B2, 2, FEAT), dtype=jnp.float32)
    eps2 = jax.random.normal(k_eps2, (B2, FEAT), dtype=jnp.float32)
    z2, mu2, std2 = vae_bottleneck(x2, w_mu, b_mu, w_var, b_var, eps2, block_b=8)
    jax.block_until_ready((z2, mu2, std2))
    x2_flat = x2.reshape(B2, -1)
    mu2_ref = x2_flat @ w_mu + b_mu
    std2_ref = jnp.exp(0.5 * (x2_flat @ w_var + b_var))
    z2_ref = (mu2_ref + eps2 * std2_ref)[:, None, :]
    assert z2.shape == (B2, 1, FEAT)
    assert jnp.allclose(mu2, mu2_ref, atol=1e-5)
    assert jnp.allclose(std2, std2_ref, atol=1e-5)
    assert jnp.allclose(z2, z2_ref, atol=1e-5)

    print("KERNEL_OK")
</pallas_src>

<mosaic_0001>
module attributes {stable_mosaic.version = 11 : i64} {
  func.func @vae_bottleneck_kernel(%arg0: i32, %arg1: memref<8x128xf32, #tpu.memory_space<vmem>>, %arg2: memref<128x128xf32, #tpu.memory_space<vmem>>, %arg3: memref<1x128xf32, #tpu.memory_space<vmem>>, %arg4: memref<8x64xf32, #tpu.memory_space<vmem>>, %arg5: memref<8x192xf32, #tpu.memory_space<vmem>>) attributes {dimension_semantics = [#tpu.dimension_semantics<parallel>], iteration_bounds = array<i64: 1>, scalar_prefetch = 0 : i64, scratch_operands = 0 : i64, tpu.core_type = #tpu.core_type<tc>, window_params = [{transform_indices = @transform_0, window_bounds = array<i64: 8, 128>}, {pipeline_mode = #tpu.pipeline_mode<synchronous>, transform_indices = @transform_1, window_bounds = array<i64: 128, 128>}, {pipeline_mode = #tpu.pipeline_mode<synchronous>, transform_indices = @transform_2, window_bounds = array<i64: 1, 128>}, {transform_indices = @transform_3, window_bounds = array<i64: 8, 64>}, {transform_indices = @transform_4, window_bounds = array<i64: 8, 192>}]} {
    %c0 = arith.constant 0 : index
    %c0_0 = arith.constant 0 : index
    %0 = vector.load %arg1[%c0, %c0_0] : memref<8x128xf32, #tpu.memory_space<vmem>>, vector<8x128xf32>
    %c0_1 = arith.constant 0 : index
    %c0_2 = arith.constant 0 : index
    %1 = vector.load %arg2[%c0_1, %c0_2] : memref<128x128xf32, #tpu.memory_space<vmem>>, vector<128x128xf32>
    %cst = arith.constant dense<0.000000e+00> : vector<8x128xf32>
    %2 = tpu.matmul %0, %1, %cst {dimension_numbers = #tpu.dot_dimension_numbers<[1], [0], [0], [1], [0, 0, 1, 1], [], []>} : vector<8x128xf32>, vector<128x128xf32>, vector<8x128xf32> -> vector<8x128xf32>
    %c0_3 = arith.constant 0 : index
    %c0_4 = arith.constant 0 : index
    %3 = vector.load %arg3[%c0_3, %c0_4] : memref<1x128xf32, #tpu.memory_space<vmem>>, vector<1x128xf32>
    %4 = vector.broadcast %3 : vector<1x128xf32> to vector<8x128xf32>
    %5 = arith.addf %2, %4 : vector<8x128xf32>
    %6 = vector.extract_strided_slice %5 {offsets = [0, 0], sizes = [8, 64], strides = [1, 1]} : vector<8x128xf32> to vector<8x64xf32>
    %7 = vector.extract_strided_slice %5 {offsets = [0, 64], sizes = [8, 64], strides = [1, 1]} : vector<8x128xf32> to vector<8x64xf32>
    %cst_5 = arith.constant 5.000000e-01 : f32
    %8 = vector.broadcast %cst_5 : f32 to vector<8x64xf32>
    %9 = arith.mulf %8, %7 : vector<8x64xf32>
    %10 = math.exp %9 : vector<8x64xf32>
    %c0_6 = arith.constant 0 : index
    %c0_7 = arith.constant 0 : index
    %11 = vector.load %arg4[%c0_6, %c0_7] : memref<8x64xf32, #tpu.memory_space<vmem>>, vector<8x64xf32>
    %12 = arith.mulf %11, %10 : vector<8x64xf32>
    %13 = arith.addf %6, %12 : vector<8x64xf32>
    %14 = tpu.concatenate %13, %6, %10 in 1 : vector<8x64xf32>, vector<8x64xf32>, vector<8x64xf32> -> vector<8x192xf32>
    %c0_8 = arith.constant 0 : index
    %c0_9 = arith.constant 0 : index
    %15 = vector.load %arg5[%c0_8, %c0_9] : memref<8x192xf32, #tpu.memory_space<vmem>>, vector<8x192xf32>
    tpu.vector_store %arg5[%c0_8, %c0_9], %14 {strides = array<i32>} : memref<8x192xf32, #tpu.memory_space<vmem>>, vector<8x192xf32>,
    return
  }
  func.func @transform_0(%arg0: i32) -> (i32, i32) {
    %c0_i32 = arith.constant 0 : i32
    %c0_i32_0 = arith.constant 0 : i32
    return %arg0, %c0_i32 : i32, i32
  }
  func.func @transform_1(%arg0: i32) -> (i32, i32) {
    %c0_i32 = arith.constant 0 : i32
    %c0_i32_0 = arith.constant 0 : i32
    %c0_i32_1 = arith.constant 0 : i32
    return %c0_i32, %c0_i32_0 : i32, i32
  }
  func.func @transform_2(%arg0: i32) -> (i32, i32) {
    %c0_i32 = arith.constant 0 : i32
    %c0_i32_0 = arith.constant 0 : i32
    %c0_i32_1 = arith.constant 0 : i32
    return %c0_i32, %c0_i32_0 : i32, i32
  }
  func.func @transform_3(%arg0: i32) -> (i32, i32) {
    %c0_i32 = arith.constant 0 : i32
    %c0_i32_0 = arith.constant 0 : i32
    return %arg0, %c0_i32 : i32, i32
  }
  func.func @transform_4(%arg0: i32) -> (i32, i32) {
    %c0_i32 = arith.constant 0 : i32
    %c0_i32_0 = arith.constant 0 : i32
    return %arg0, %c0_i32 : i32, i32
  }
}

</mosaic_0001>

<llo_original>
// kernel: tpu_custom_call.1
$region0: #{tpu_custom_call.1}
  #allocation0 [shape = 'u32[]', space=smem, size = 0x4, offset = 0x4, fixed_abs, tag = 'smem constant byte address 0x4 - core index']
  #allocation1 [shape = 'u32[144,128]{1,0:T(1,128)}', space=vmem, size = 0x12000, scoped, tag = 'internal scratch']
  %s0 = inlined_call_operand.hbm [shape: f32[8,128], index: 0, kind: input, shape index: {}]
  %s1 = inlined_call_operand.hbm [shape: f32[128,128], index: 1, kind: input, shape index: {}]
  %s2 = inlined_call_operand.vmem [shape: f32[1,128], index: 2, kind: input, shape index: {}]
  %s3 = inlined_call_operand.vmem [shape: f32[8,64], index: 3, kind: input, shape index: {}]
  %s4 = inlined_call_operand.hbm [shape: f32[8,192], index: 4, kind: output, shape index: {}]
  %s5 = sld [smem:[#allocation0]]
  $region34: #{tpu_custom_call.1} parent=0
    _
  %s7 = ssub.s32 1, %s5
  %s8 = scalar_select 0, %s7, %s5
  $region1: #{tpu_custom_call.1} parent=0
    #allocation2 [shape = 'u8[4096]{0}', space=vmem, size = 0x1000, scoped, tag = 'input window, operand 0, single buffered']
    #allocation3 [shape = 's32[1]{0}', space=sflag, size = 0x4, scoped, tag = 'scoped memory for tpu_custom_call.1']
    #allocation4 [shape = 's32[1]{0}', space=sflag, size = 0x4, scoped, tag = 'scoped memory for tpu_custom_call.1']
    #allocation5 [shape = 'u8[65536]{0}', space=vmem, size = 0x10000, scoped, tag = 'input window, operand 1, single buffered']
    #allocation6 [shape = 's32[1]{0}', space=sflag, size = 0x4, scoped, tag = 'scoped memory for tpu_custom_call.1']
    #allocation7 [shape = 'u8[8192]{0}', space=vmem, size = 0x2000, scoped, tag = 'output window, operand 0, single buffered']
    %9 = vsyncpa [#allocation3], 0
    %10 = vsyncpa [#allocation6], 0
    %11 = vsyncpa [#allocation4], 0
    // Predicated region
    $region2: #{tpu_custom_call.1} parent=1 // pred_check
      _
    $region3: #{tpu_custom_call.1} parent=1 // pred_check_branch
      %13 = sbr.rel (0) target = $region5
    $region4: #{tpu_custom_call.1} parent=1 // pred_region
      %s15 = ssub.s32 128, 128
      %16 = vsyncadd [#allocation3], %s15
      %s18 = sshll.u32 [#allocation2], 4
      %s19 = int_to_ptr.vmem [resolvable:$true] %s18
      %21 = dma.hbm_to_vmem [thread:$0]  %s0, 128, %s19, [#allocation3]
    $region5: #{tpu_custom_call.1} parent=1 // pred_fallthru
      _
    // Predicated region
    $region6: #{tpu_custom_call.1} parent=1 // pred_check
      _
    $region7: #{tpu_custom_call.1} parent=1 // pred_check_branch
      %23 = sbr.rel (0) target = $region9
    $region8: #{tpu_custom_call.1} parent=1 // pred_region
      %s25 = ssub.s32 2048, 2048
      %26 = vsyncadd [#allocation6], %s25
      %s27 = sshll.u32 [#allocation5], 4
      %s28 = int_to_ptr.vmem [resolvable:$true] %s27
      %33 = dma.hbm_to_vmem [thread:$0]  %s1, 2048, %s28, [#allocation6], 128, 128, 8
    $region9: #{tpu_custom_call.1} parent=1 // pred_fallthru
      _
    // Predicated region
    $region10: #{tpu_custom_call.1} parent=1 // pred_check
      _
    $region11: #{tpu_custom_call.1} parent=1 // pred_check_branch
      %35 = sbr.rel (0) target = $region13
    $region12: #{tpu_custom_call.1} parent=1 // pred_region
      _
    $region13: #{tpu_custom_call.1} parent=1 // pred_fallthru
      _
    // Predicated region
    $region14: #{tpu_custom_call.1} parent=1 // pred_check
      _
    $region15: #{tpu_custom_call.1} parent=1 // pred_check_branch
      %37 = sbr.rel (0) target = $region17
    $region16: #{tpu_custom_call.1} parent=1 // pred_region
      _
    $region17: #{tpu_custom_call.1} parent=1 // pred_fallthru
      _
    // Predicated region
    $region18: #{tpu_custom_call.1} parent=1 // pred_check
      _
    $region19: #{tpu_custom_call.1} parent=1 // pred_check_branch
      %39 = sbr.rel (0) target = $region21
    $region20: #{tpu_custom_call.1} parent=1 // pred_region
      %40 = dma.done [#allocation3], 128
    $region21: #{tpu_custom_call.1} parent=1 // pred_fallthru
      _
    // Predicated region
    $region22: #{tpu_custom_call.1} parent=1 // pred_check
      _
    $region23: #{tpu_custom_call.1} parent=1 // pred_check_branch
      %42 = sbr.rel (0) target = $region25
    $region24: #{tpu_custom_call.1} parent=1 // pred_region
      %43 = dma.done [#allocation6], 2048
    $region25: #{tpu_custom_call.1} parent=1 // pred_fallthru
      _
    %v44 = vld [vmem:[#allocation2] sm:$0xff]
    %v45 = vld [vmem:[#allocation5] sm:$0xff]
    %v46 = vld [vmem:[#allocation5 + $0x8] sm:$0xff]
    %v47 = vld [vmem:[#allocation5 + $0x10] sm:$0xff]
    %v48 = vld [vmem:[#allocation5 + $0x18] sm:$0xff]
    %v49 = vld [vmem:[#allocation5 + $0x20] sm:$0xff]
    %v50 = vld [vmem:[#allocation5 + $0x28] sm:$0xff]
    %v51 = vld [vmem:[#allocation5 + $0x30] sm:$0xff]
    %v52 = vld [vmem:[#allocation5 + $0x38] sm:$0xff]
    %v53 = vld [vmem:[#allocation5 + $0x40] sm:$0xff]
    %v54 = vld [vmem:[#allocation5 + $0x48] sm:$0xff]
    %v55 = vld [vmem:[#allocation5 + $0x50] sm:$0xff]
    %v56 = vld [vmem:[#allocation5 + $0x58] sm:$0xff]
    %v57 = vld [vmem:[#allocation5 + $0x60] sm:$0xff]
    %v58 = vld [vmem:[#allocation5 + $0x68] sm:$0xff]
    %v59 = vld [vmem:[#allocation5 + $0x70] sm:$0xff]
    %v60 = vld [vmem:[#allocation5 + $0x78] sm:$0xff]
    %v61 = vld [vmem:[%s2] sm:$0x1]
    %v63 = vlaneseq
    %v64 = vshrl.u32 %v63, 7
    %v65 = vsub.s32 0, %v64
    %v66 = vrot.slane %v61, %v65
    %68 = vmatprep.subr.mxu0 0.0
    %69 = vmatpush1.msra.mxu0 %v45
    %70 = vmatprep.subr.mxu0 0.0
    %71 = vmatpush1.msra.mxu0 %v46
    %72 = vmatprep.subr.mxu0 0.0
    %73 = vmatpush1.msra.mxu0 %v47
    %74 = vmatprep.subr.mxu0 0.0
    %75 = vmatpush1.msra.mxu0 %v48
    %76 = vmatprep.subr.mxu0 0.0
    %77 = vmatpush1.msra.mxu0 %v49
    %78 = vmatprep.subr.mxu0 0.0
    %79 = vmatpush1.msra.mxu0 %v50
    %80 = vmatprep.subr.mxu0 0.0
    %81 = vmatpush1.msra.mxu0 %v51
    %82 = vmatprep.subr.mxu0 0.0
    %83 = vmatpush1.msra.mxu0 %v52
    %84 = vmatprep.subr.mxu0 0.0
    %85 = vmatpush1.msra.mxu0 %v53
    %86 = vmatprep.subr.mxu0 0.0
    %87 = vmatpush1.msra.mxu0 %v54
    %88 = vmatprep.subr.mxu0 0.0
    %89 = vmatpush1.msra.mxu0 %v55
    %90 = vmatprep.subr.mxu0 0.0
    %91 = vmatpush1.msra.mxu0 %v56
    %92 = vmatprep.subr.mxu0 0.0
    %93 = vmatpush1.msra.mxu0 %v57
    %94 = vmatprep.subr.mxu0 0.0
    %95 = vmatpush1.msra.mxu0 %v58
    %96 = vmatprep.subr.mxu0 0.0
    %97 = vmatpush1.msra.mxu0 %v59
    %98 = vmatprep.subr.mxu0 0.0
    %99 = vmatpush1.msra.mxu0 %v60
    %100 = vmatprep.subr.mxu0 0.0
    %101 = vmatpush1.msra.mxu0 0.0
    %102 = vmatprep.subr.mxu0 0.0
    %103 = vmatpush1.msra.mxu0 0.0
    %104 = vmatprep.subr.mxu0 0.0
    %105 = vmatpush1.msra.mxu0 0.0
    %106 = vmatprep.subr.mxu0 0.0
    %107 = vmatpush1.msra.mxu0 0.0
    %108 = vmatprep.subr.mxu0 0.0
    %109 = vmatpush1.msra.mxu0 0.0
    %110 = vmatprep.subr.mxu0 0.0
    %111 = vmatpush1.msra.mxu0 0.0
    %112 = vmatprep.subr.mxu0 0.0
    %113 = vmatpush1.msra.mxu0 0.0
    %114 = vmatprep.subr.mxu0 0.0
    %115 = vmatpush1.msra.mxu0 0.0
    %116 = vmatprep.subr.mxu0 0.0
    %117 = vmatpush1.msra.mxu0 0.0
    %118 = vmatprep.subr.mxu0 0.0
    %119 = vmatpush1.msra.mxu0 0.0
    %120 = vmatprep.subr.mxu0 0.0
    %121 = vmatpush1.msra.mxu0 0.0
    %122 = vmatprep.subr.mxu0 0.0
    %123 = vmatpush1.msra.mxu0 0.0
    %124 = vmatprep.subr.mxu0 0.0
    %125 = vmatpush1.msra.mxu0 0.0
    %126 = vmatprep.subr.mxu0 0.0
    %127 = vmatpush1.msra.mxu0 0.0
    %128 = vmatprep.subr.mxu0 0.0
    %129 = vmatpush1.msra.mxu0 0.0
    %130 = vmatprep.subr.mxu0 0.0
    %131 = vmatpush1.msra.mxu0 0.0
    %132 = vmatprep.mubr.f32.mxu0 0.0
    %133 = vmatmul.mubr.f32.gmra.mrb[0].mxu0 %v44
    %v134 = vpop.f32.mrb[0].mxu0
    %v135 = vadd.f32 %v66, %v134
    %v136 = vpop.f32.mrb[0].mxu0
    %137 = vdwg.mxu0
    %v138 = vmul.f32 %v135, 0.5
    %v139 = vmul.f32 %v138, 1.442695
    %v140 = vpow.pop %v139
    %v141 = vld [vmem:[%s3] sm:$0xff]
    %143 = vrot.lane.b32.xlu0 %v140, 64
    %v144 = vpop.permute.xlu0 %143
    %v146 = vmul.f32 %v141, %v144
    %v147 = vadd.f32 %v135, %v146
    %149 = vrot.lane.b32.xlu0 %v135, 64
    %v150 = vpop.permute.xlu0 %149
    %vm152 = vcmask 523264
    %v153 = vsel %vm152, %v147, %v150
    %154 = vst [vmem:[#allocation7] sm:$0xff] %v153
    %155 = vst.msk [vmem:[#allocation7 + $0x8] sm:$0xff] %vm152, %v144
    // Predicated region
    $region26: #{tpu_custom_call.1} parent=1 // pred_check
      _
    $region27: #{tpu_custom_call.1} parent=1 // pred_check_branch
      %157 = sbr.rel (0) target = $region29
    $region28: #{tpu_custom_call.1} parent=1 // pred_region
      %s159 = ssub.s32 256, 256
      %160 = vsyncadd [#allocation4], %s159
      %s162 = sshll.u32 [#allocation7], 4
      %s163 = int_to_ptr.vmem [resolvable:$true] %s162
      %165 = dma.vmem_to_hbm [thread:$0]  %s163, 256, %s4, [#allocation4]
    $region29: #{tpu_custom_call.1} parent=1 // pred_fallthru
      _
    // Predicated region
    $region30: #{tpu_custom_call.1} parent=1 // pred_check
      _
    $region31: #{tpu_custom_call.1} parent=1 // pred_check_branch
      %167 = sbr.rel (0) target = $region33
    $region32: #{tpu_custom_call.1} parent=1 // pred_region
      %168 = dma.done [#allocation4], 256
    $region33: #{tpu_custom_call.1} parent=1 // pred_fallthru
      _
    %169 = vsyncpa [#allocation3], 1
    %170 = vsyncpa [#allocation6], 1
    %171 = vsyncpa [#allocation4], 1

</llo_original>
